<compile_context>
chip_gen: v7x
topology: tpu7x:2x2x1
jax: 0.10.0
libtpu: 0.0.40
codegen_flags: <defaults>
</compile_context>

<pallas_src>
import jax
import jax.numpy as jnp
from jax.experimental import pallas as pl
from jax.experimental.pallas import tpu as pltpu


# --------------------------- Pallas kernels ---------------------------------

def _linear_sub_low_kernel_general(pq_ref, w_ref, o_ref):
    """o = pq + pq @ W, W = [[0, S^T], [0, 0]] (2*dim, 2*dim), f32 accumulation.

    Used when dim is not a multiple of 128: the padded full-K matmul avoids any
    in-kernel lane slicing (only free when lane-tile aligned), and the residual
    add + store is a single full-width lane-contiguous store.
    """
    pq = pq_ref[...]                                           # (tb, 2*dim)
    upd = jnp.dot(pq, w_ref[...],
                  preferred_element_type=jnp.float32)          # (tb, 2*dim); p cols are 0
    o_ref[...] = (pq.astype(jnp.float32) + upd).astype(o_ref.dtype)


def _linear_sub_low_kernel_aligned(pq_ref, w_ref, oq_ref):
    """q-half-only update for dim % 128 == 0.

    Slices of pq are lane-tile aligned (zero-cost views); only the q half is
    upcast to f32; only the q columns are stored (p half lives in the aliased
    input buffer and is never rewritten).
    """
    dim = w_ref.shape[0]                                       # W = S^T, (dim, dim)
    p = pq_ref[:, :dim]                                        # (tb, dim)
    q = pq_ref[:, dim:]                                        # (tb, dim)
    upd = jnp.dot(p, w_ref[...],
                  preferred_element_type=jnp.float32)          # (tb, dim)
    oq_ref[...] = (q.astype(jnp.float32) + upd).astype(oq_ref.dtype)


# ----------------------------- tiling helper ---------------------------------

def _choose_block_b(B, F, itemsize):
    """VMEM-budgeted batch tile; >=2 grid steps when possible (v7x dual-TC)."""
    sub = 16 if itemsize < 4 else 8          # bf16 packs 16 rows / vreg sublane-pair
    # ~per-row VMEM footprint: double-buffered in + out + f32 temporaries.
    row_bytes = F * (4 * itemsize + 8)
    budget = 8 * 1024 * 1024                 # safe under v5e/v7x default scoped VMEM
    tb = max(sub, (budget // max(row_bytes, 1)) // sub * sub)
    tb = min(tb, 8192)
    if tb >= B:
        if B > 4 * sub:
            # split into two parallel grid steps so both v7x TensorCores get work
            half = (B + 1) // 2
            tb = ((half + sub - 1) // sub) * sub
        else:
            tb = B                           # single full-array block
    return tb


# ----------------------------- JAX wrapper ------------------------------------

def linear_sub_low_forward(pq, A, dim, inverse=False, block_b=None):
    """Equivalent of linear_sub_low(dim).forward(pq, inverse) with parameter A."""
    B, F = pq.shape
    assert F == 2 * dim
    sign = -1.0 if inverse else 1.0

    # Only the (dim, dim) lower-left block of the 2dim x 2dim matrix does work:
    #   out_q = q + p @ (sign*(A + A.T)).T
    s_t = (sign * (A + A.T)).T.astype(pq.dtype)                 # (dim, dim)

    itemsize = jnp.dtype(pq.dtype).itemsize
    sub = 16 if itemsize < 4 else 8
    tb = block_b if block_b is not None else _choose_block_b(B, F, itemsize)
    if tb < B:
        assert tb % sub == 0, "batch tile must be sublane-aligned (8 f32 / 16 bf16)"
    grid = (pl.cdiv(B, tb),)                 # no wrapper-side pad; Pallas clips the tail
    cparams = pltpu.CompilerParams(dimension_semantics=("parallel",))

    if dim % 128 == 0:
        # Lane-aligned: compute/store only the q half; alias output onto input so
        # the unchanged p half is never rewritten to HBM.
        return pl.pallas_call(
            _linear_sub_low_kernel_aligned,
            out_shape=jax.ShapeDtypeStruct((B, F), pq.dtype),
            grid=grid,
            in_specs=[
                pl.BlockSpec((tb, F), lambda i: (i, 0)),        # batch-tiled input
                pl.BlockSpec((dim, dim), lambda i: (0, 0)),     # tiny weight, resident
            ],
            out_specs=pl.BlockSpec((tb, dim), lambda i: (i, 1)),  # q columns only
            input_output_aliases={0: 0},
            compiler_params=cparams,
        )(pq, s_t)

    # General / small-dim path: padded full-K weight, no in-kernel slicing,
    # single full-width residual add + store.
    w = jnp.zeros((F, F), pq.dtype).at[:dim, dim:].set(s_t)     # [[0, S^T], [0, 0]]
    return pl.pallas_call(
        _linear_sub_low_kernel_general,
        out_shape=jax.ShapeDtypeStruct((B, F), pq.dtype),
        grid=grid,
        in_specs=[
            pl.BlockSpec((tb, F), lambda i: (i, 0)),
            pl.BlockSpec((F, F), lambda i: (0, 0)),
        ],
        out_specs=pl.BlockSpec((tb, F), lambda i: (i, 0)),
        compiler_params=cparams,
    )(pq, w)


# ------------------------- pure-JAX reference ---------------------------------

def linear_sub_low_reference(pq, A, dim, inverse=False):
    sign = -1.0 if inverse else 1.0
    m = jnp.eye(2 * dim, dtype=pq.dtype)
    m = m.at[dim:, :dim].set((sign * (A + A.T)).astype(pq.dtype))
    return (m @ pq.T).T


# --------------------------------- main ----------------------------------------

if __name__ == "__main__":
    key = jax.random.PRNGKey(0)
    kx, ka, kx2, kx3, ka3 = jax.random.split(key, 5)

    # ---- small-dim path (dim=4 -> features=8), forward and inverse ----
    dim = 4
    batch = 8
    pq = jax.random.normal(kx, (batch, 2 * dim), dtype=jnp.float32)
    A = jax.random.normal(ka, (dim, dim), dtype=jnp.float32)   # nn.Parameter(randn(dim, dim))

    for inv in (False, True):
        out = jax.block_until_ready(linear_sub_low_forward(pq, A, dim, inverse=inv))
        ref = linear_sub_low_reference(pq, A, dim, inverse=inv)
        assert out.shape == pq.shape and out.dtype == pq.dtype
        assert jnp.allclose(out, ref, atol=1e-5, rtol=1e-5)

    # ---- ragged multi-block batch (no wrapper-side pad/slice) ----
    batch2 = 20
    pq2 = jax.random.normal(kx2, (batch2, 2 * dim), dtype=jnp.float32)
    out2 = jax.block_until_ready(linear_sub_low_forward(pq2, A, dim, block_b=8))
    ref2 = linear_sub_low_reference(pq2, A, dim)
    assert out2.shape == pq2.shape
    assert jnp.allclose(out2, ref2, atol=1e-5, rtol=1e-5)

    # ---- lane-aligned path (dim % 128 == 0): q-half-only compute/store with the
    # output aliased onto the input; ragged batch exercises the partial block ----
    dim3 = 128
    batch3 = 50
    pq3 = jax.random.normal(kx3, (batch3, 2 * dim3), dtype=jnp.float32)
    A3 = jax.random.normal(ka3, (dim3, dim3), dtype=jnp.float32)
    for inv in (False, True):
        out3 = jax.block_until_ready(linear_sub_low_forward(pq3, A3, dim3, inverse=inv))
        ref3 = linear_sub_low_reference(pq3, A3, dim3, inverse=inv)
        assert out3.shape == pq3.shape and out3.dtype == pq3.dtype
        # p half must be exact; q half allows MXU-pass rounding differences.
        assert jnp.array_equal(out3[:, :dim3], pq3[:, :dim3])
        assert jnp.allclose(out3, ref3, atol=1e-2, rtol=1e-3)

    print("KERNEL_OK")
</pallas_src>

<mosaic_0001>
module attributes {stable_mosaic.version = 11 : i64} {
  func.func @_linear_sub_low_kernel_general(%arg0: i32, %arg1: memref<8x8xf32, #tpu.memory_space<vmem>>, %arg2: memref<8x8xf32, #tpu.memory_space<vmem>>, %arg3: memref<8x8xf32, #tpu.memory_space<vmem>>) attributes {dimension_semantics = [#tpu.dimension_semantics<parallel>], iteration_bounds = array<i64: 1>, scalar_prefetch = 0 : i64, scratch_operands = 0 : i64, tpu.core_type = #tpu.core_type<tc>, window_params = [{transform_indices = @transform_0, window_bounds = array<i64: 8, 8>}, {pipeline_mode = #tpu.pipeline_mode<synchronous>, transform_indices = @transform_1, window_bounds = array<i64: 8, 8>}, {transform_indices = @transform_2, window_bounds = array<i64: 8, 8>}]} {
    %c0 = arith.constant 0 : index
    %c0_0 = arith.constant 0 : index
    %0 = vector.load %arg1[%c0, %c0_0] : memref<8x8xf32, #tpu.memory_space<vmem>>, vector<8x8xf32>
    %c0_1 = arith.constant 0 : index
    %c0_2 = arith.constant 0 : index
    %1 = vector.load %arg2[%c0_1, %c0_2] : memref<8x8xf32, #tpu.memory_space<vmem>>, vector<8x8xf32>
    %cst = arith.constant dense<0.000000e+00> : vector<8x8xf32>
    %2 = tpu.matmul %0, %1, %cst {dimension_numbers = #tpu.dot_dimension_numbers<[1], [0], [0], [1], [0, 0, 1, 1], [], []>} : vector<8x8xf32>, vector<8x8xf32>, vector<8x8xf32> -> vector<8x8xf32>
    %3 = arith.addf %0, %2 : vector<8x8xf32>
    %c0_3 = arith.constant 0 : index
    %c0_4 = arith.constant 0 : index
    %4 = vector.load %arg3[%c0_3, %c0_4] : memref<8x8xf32, #tpu.memory_space<vmem>>, vector<8x8xf32>
    tpu.vector_store %arg3[%c0_3, %c0_4], %3 {strides = array<i32>} : memref<8x8xf32, #tpu.memory_space<vmem>>, vector<8x8xf32>,
    return
  }
  func.func @transform_0(%arg0: i32) -> (i32, i32) {
    %c0_i32 = arith.constant 0 : i32
    %c0_i32_0 = arith.constant 0 : i32
    return %arg0, %c0_i32 : i32, i32
  }
  func.func @transform_1(%arg0: i32) -> (i32, i32) {
    %c0_i32 = arith.constant 0 : i32
    %c0_i32_0 = arith.constant 0 : i32
    %c0_i32_1 = arith.constant 0 : i32
    return %c0_i32, %c0_i32_0 : i32, i32
  }
  func.func @transform_2(%arg0: i32) -> (i32, i32) {
    %c0_i32 = arith.constant 0 : i32
    %c0_i32_0 = arith.constant 0 : i32
    return %arg0, %c0_i32 : i32, i32
  }
}

</mosaic_0001>

<llo_original>
// kernel: tpu_custom_call.1
$region0: #{tpu_custom_call.1}
  #allocation0 [shape = 'u32[]', space=smem, size = 0x4, offset = 0x4, fixed_abs, tag = 'smem constant byte address 0x4 - core index']
  #allocation1 [shape = 'u32[144,128]{1,0:T(1,128)}', space=vmem, size = 0x12000, scoped, tag = 'internal scratch']
  %s0 = inlined_call_operand.hbm [shape: f32[8,8], index: 0, kind: input, shape index: {}]
  %s1 = inlined_call_operand.hbm [shape: f32[8,8], index: 1, kind: input, shape index: {}]
  %s2 = inlined_call_operand.hbm [shape: f32[8,8], index: 2, kind: output, shape index: {}]
  %s3 = sld [smem:[#allocation0]]
  $region26: #{tpu_custom_call.1} parent=0
    _
  %s5 = ssub.s32 1, %s3
  %s6 = scalar_select 0, %s5, %s3
  $region1: #{tpu_custom_call.1} parent=0
    #allocation2 [shape = 'u8[4096]{0}', space=vmem, size = 0x1000, scoped, tag = 'input window, operand 0, single buffered']
    #allocation3 [shape = 's32[1]{0}', space=sflag, size = 0x4, scoped, tag = 'scoped memory for tpu_custom_call.1']
    #allocation4 [shape = 's32[1]{0}', space=sflag, size = 0x4, scoped, tag = 'scoped memory for tpu_custom_call.1']
    #allocation5 [shape = 'u8[4096]{0}', space=vmem, size = 0x1000, scoped, tag = 'input window, operand 1, single buffered']
    #allocation6 [shape = 's32[1]{0}', space=sflag, size = 0x4, scoped, tag = 'scoped memory for tpu_custom_call.1']
    #allocation7 [shape = 'u8[4096]{0}', space=vmem, size = 0x1000, scoped, tag = 'output window, operand 0, single buffered']
    %7 = vsyncpa [#allocation3], 0
    %8 = vsyncpa [#allocation6], 0
    %9 = vsyncpa [#allocation4], 0
    // Predicated region
    $region2: #{tpu_custom_call.1} parent=1 // pred_check
      _
    $region3: #{tpu_custom_call.1} parent=1 // pred_check_branch
      %11 = sbr.rel (0) target = $region5
    $region4: #{tpu_custom_call.1} parent=1 // pred_region
      %s13 = ssub.s32 128, 128
      %14 = vsyncadd [#allocation3], %s13
      %s16 = sshll.u32 [#allocation2], 4
      %s17 = int_to_ptr.vmem [resolvable:$true] %s16
      %19 = dma.hbm_to_vmem [thread:$0]  %s0, 128, %s17, [#allocation3]
    $region5: #{tpu_custom_call.1} parent=1 // pred_fallthru
      _
    // Predicated region
    $region6: #{tpu_custom_call.1} parent=1 // pred_check
      _
    $region7: #{tpu_custom_call.1} parent=1 // pred_check_branch
      %21 = sbr.rel (0) target = $region9
    $region8: #{tpu_custom_call.1} parent=1 // pred_region
      %s23 = ssub.s32 128, 128
      %24 = vsyncadd [#allocation6], %s23
      %s26 = sshll.u32 [#allocation5], 4
      %s27 = int_to_ptr.vmem [resolvable:$true] %s26
      %29 = dma.hbm_to_vmem [thread:$0]  %s1, 128, %s27, [#allocation6]
    $region9: #{tpu_custom_call.1} parent=1 // pred_fallthru
      _
    // Predicated region
    $region10: #{tpu_custom_call.1} parent=1 // pred_check
      _
    $region11: #{tpu_custom_call.1} parent=1 // pred_check_branch
      %31 = sbr.rel (0) target = $region13
    $region12: #{tpu_custom_call.1} parent=1 // pred_region
      %32 = dma.done [#allocation3], 128
    $region13: #{tpu_custom_call.1} parent=1 // pred_fallthru
      _
    // Predicated region
    $region14: #{tpu_custom_call.1} parent=1 // pred_check
      _
    $region15: #{tpu_custom_call.1} parent=1 // pred_check_branch
      %34 = sbr.rel (0) target = $region17
    $region16: #{tpu_custom_call.1} parent=1 // pred_region
      %35 = dma.done [#allocation6], 128
    $region17: #{tpu_custom_call.1} parent=1 // pred_fallthru
      _
    %v36 = vld [vmem:[#allocation2] sm:$0xff]
    %v37 = vld [vmem:[#allocation5] sm:$0xff]
    %vm38 = vcmask 64512
    %v40 = vsel %vm38, %v36, 0
    %42 = vmatprep.subr.mxu0 0.0
    %43 = vmatpush1.msra.mxu0 %v37
    %44 = vmatprep.subr.mxu0 0.0
    %45 = vmatpush1.msra.mxu0 0.0
    %46 = vmatprep.subr.mxu0 0.0
    %47 = vmatpush1.msra.mxu0 0.0
    %48 = vmatprep.subr.mxu0 0.0
    %49 = vmatpush1.msra.mxu0 0.0
    %50 = vmatprep.subr.mxu0 0.0
    %51 = vmatpush1.msra.mxu0 0.0
    %52 = vmatprep.subr.mxu0 0.0
    %53 = vmatpush1.msra.mxu0 0.0
    %54 = vmatprep.subr.mxu0 0.0
    %55 = vmatpush1.msra.mxu0 0.0
    %56 = vmatprep.subr.mxu0 0.0
    %57 = vmatpush1.msra.mxu0 0.0
    %58 = vmatprep.subr.mxu0 0.0
    %59 = vmatpush1.msra.mxu0 0.0
    %60 = vmatprep.subr.mxu0 0.0
    %61 = vmatpush1.msra.mxu0 0.0
    %62 = vmatprep.subr.mxu0 0.0
    %63 = vmatpush1.msra.mxu0 0.0
    %64 = vmatprep.subr.mxu0 0.0
    %65 = vmatpush1.msra.mxu0 0.0
    %66 = vmatprep.subr.mxu0 0.0
    %67 = vmatpush1.msra.mxu0 0.0
    %68 = vmatprep.subr.mxu0 0.0
    %69 = vmatpush1.msra.mxu0 0.0
    %70 = vmatprep.subr.mxu0 0.0
    %71 = vmatpush1.msra.mxu0 0.0
    %72 = vmatprep.subr.mxu0 0.0
    %73 = vmatpush1.msra.mxu0 0.0
    %74 = vmatprep.subr.mxu0 0.0
    %75 = vmatpush1.msra.mxu0 0.0
    %76 = vmatprep.subr.mxu0 0.0
    %77 = vmatpush1.msra.mxu0 0.0
    %78 = vmatprep.subr.mxu0 0.0
    %79 = vmatpush1.msra.mxu0 0.0
    %80 = vmatprep.subr.mxu0 0.0
    %81 = vmatpush1.msra.mxu0 0.0
    %82 = vmatprep.subr.mxu0 0.0
    %83 = vmatpush1.msra.mxu0 0.0
    %84 = vmatprep.subr.mxu0 0.0
    %85 = vmatpush1.msra.mxu0 0.0
    %86 = vmatprep.subr.mxu0 0.0
    %87 = vmatpush1.msra.mxu0 0.0
    %88 = vmatprep.subr.mxu0 0.0
    %89 = vmatpush1.msra.mxu0 0.0
    %90 = vmatprep.subr.mxu0 0.0
    %91 = vmatpush1.msra.mxu0 0.0
    %92 = vmatprep.subr.mxu0 0.0
    %93 = vmatpush1.msra.mxu0 0.0
    %94 = vmatprep.subr.mxu0 0.0
    %95 = vmatpush1.msra.mxu0 0.0
    %96 = vmatprep.subr.mxu0 0.0
    %97 = vmatpush1.msra.mxu0 0.0
    %98 = vmatprep.subr.mxu0 0.0
    %99 = vmatpush1.msra.mxu0 0.0
    %100 = vmatprep.subr.mxu0 0.0
    %101 = vmatpush1.msra.mxu0 0.0
    %102 = vmatprep.subr.mxu0 0.0
    %103 = vmatpush1.msra.mxu0 0.0
    %104 = vmatprep.subr.mxu0 0.0
    %105 = vmatpush1.msra.mxu0 0.0
    %106 = vmatprep.mubr.f32.mxu0 0.0
    %107 = vmatmul.mubr.f32.gmra.mrb[0].mxu0 %v40
    %v108 = vpop.f32.mrb[0].mxu0
    %v109 = vadd.f32 0.0, %v108
    %v110 = vpop.f32.mrb[0].mxu0
    %111 = vdwg.mxu0
    %v112 = vadd.f32 %v36, %v109
    %113 = vst.msk [vmem:[#allocation7] sm:$0xff] %vm38, %v112
    // Predicated region
    $region18: #{tpu_custom_call.1} parent=1 // pred_check
      _
    $region19: #{tpu_custom_call.1} parent=1 // pred_check_branch
      %115 = sbr.rel (0) target = $region21
    $region20: #{tpu_custom_call.1} parent=1 // pred_region
      %s117 = ssub.s32 128, 128
      %118 = vsyncadd [#allocation4], %s117
      %s120 = sshll.u32 [#allocation7], 4
      %s121 = int_to_ptr.vmem [resolvable:$true] %s120
      %123 = dma.vmem_to_hbm [thread:$0]  %s121, 128, %s2, [#allocation4]
    $region21: #{tpu_custom_call.1} parent=1 // pred_fallthru
      _
    // Predicated region
    $region22: #{tpu_custom_call.1} parent=1 // pred_check
      _
    $region23: #{tpu_custom_call.1} parent=1 // pred_check_branch
      %125 = sbr.rel (0) target = $region25
    $region24: #{tpu_custom_call.1} parent=1 // pred_region
      %126 = dma.done [#allocation4], 128
    $region25: #{tpu_custom_call.1} parent=1 // pred_fallthru
      _
    %127 = vsyncpa [#allocation3], 1
    %128 = vsyncpa [#allocation6], 1
    %129 = vsyncpa [#allocation4], 1

</llo_original>
